<compile_context>
chip_gen: v6e
topology: v6e:2x2x1
jax: 0.10.0
libtpu: 0.0.40
codegen_flags: <defaults>
</compile_context>

<pallas_src>
import math

import jax
import jax.numpy as jnp
from jax.experimental import pallas as pl
from jax.experimental.pallas import tpu as pltpu


def _round_up(x, m):
    return ((x + m - 1) // m) * m


def _pick_tile(padded_dim, align, max_tile):
    """Largest multiple of `align` that divides `padded_dim` and is <= max_tile."""
    best = align
    t = align
    limit = min(max_tile, padded_dim)
    while t <= limit:
        if padded_dim % t == 0:
            best = t
        t += align
    return best


# ----------------------------------------------------------------------------
# Kernels
# ----------------------------------------------------------------------------
def _resident_linear_kernel(x_ref, wt_ref, b_ref, o_ref):
    # x_ref: (tm, Kp) bf16 | wt_ref: (Kp, Np) bf16, fully VMEM-resident
    # b_ref: (1, Np) f32   | o_ref: (tm, Np)
    o_ref[...] = (
        jnp.dot(x_ref[...], wt_ref[...], preferred_element_type=jnp.float32)
        + b_ref[...]
    ).astype(o_ref.dtype)


def _tiled_linear_kernel(x_ref, wt_ref, b_ref, o_ref, acc_ref):
    # Fallback path (weight too large for VMEM residency).
    k = pl.program_id(2)
    partial = jnp.dot(x_ref[...], wt_ref[...], preferred_element_type=jnp.float32)

    @pl.when(k == 0)
    def _():
        acc_ref[...] = partial          # direct write: no zero-init store

    @pl.when(k != 0)
    def _():
        acc_ref[...] = acc_ref[...] + partial

    @pl.when(k == pl.num_programs(2) - 1)
    def _():
        o_ref[...] = (acc_ref[...] + b_ref[...]).astype(o_ref.dtype)


# ----------------------------------------------------------------------------
# Host-side wrappers
# ----------------------------------------------------------------------------
def prepare_classifier_params(weight, bias, *, compute_dtype=jnp.bfloat16):
    """One-time parameter prep: transpose, pad to (8,128) multiples, cast.

    weight: (N, K)  bias: (N,)
    Returns dict with wt_p: (Kp, Np) compute_dtype and b_p: (1, Np) float32.
    """
    N, K = weight.shape
    Kp = _round_up(K, 128)
    Np = _round_up(N, 128)
    wt = weight.T.astype(compute_dtype)
    if (Kp, Np) == (K, N):
        wt_p = wt
    else:
        wt_p = jnp.zeros((Kp, Np), compute_dtype).at[:K, :N].set(wt)
    b_p = jnp.zeros((1, Np), jnp.float32).at[0, :N].set(bias.astype(jnp.float32))
    return dict(wt_p=wt_p, b_p=b_p, K=K, N=N, Kp=Kp, Np=Np,
                compute_dtype=compute_dtype)


_TINY_PROBLEM_MACS = 1 << 20            # below this, launch overhead dominates
_RESIDENT_VMEM_BUDGET = 40 * 1024 * 1024  # headroom vs v7x's 64 MiB physical VMEM


def classifier_forward(x, weight=None, bias=None, *, params=None,
                       compute_dtype=jnp.bfloat16, tm=256, force_pallas=False):
    """y = x @ weight.T + bias  (PyTorch nn.Linear forward).

    x: (..., K)   weight: (N, K)   bias: (N,)   ->   (..., N)
    Pass `params=prepare_classifier_params(weight, bias)` to amortize the
    transpose / pad / cast across calls.
    """
    if params is None:
        assert weight is not None and bias is not None
        params = prepare_classifier_params(weight, bias,
                                           compute_dtype=compute_dtype)
    compute_dtype = params["compute_dtype"]
    K, N, Kp, Np = params["K"], params["N"], params["Kp"], params["Np"]
    wt_p, b_p = params["wt_p"], params["b_p"]

    assert x.shape[-1] == K
    lead = x.shape[:-1]
    x2 = x.reshape(-1, K)
    M = x2.shape[0]
    out_dtype = x.dtype

    # Tiny-problem fast path: pallas_call launch + pad/slice would dominate.
    if not force_pallas and (M * K * N) < _TINY_PROBLEM_MACS:
        y = jnp.dot(x2.astype(compute_dtype), wt_p[:K, :N],
                    preferred_element_type=jnp.float32)
        y = (y + b_p[0, :N]).astype(out_dtype)
        return y.reshape(*lead, N)

    # Round M to a sublane multiple, then pick an M-tile that divides it.
    Mp = _round_up(M, 8)
    tm = _pick_tile(Mp, 8, tm)
    # Keep >= 2 parallel blocks when possible (second TensorCore on v7x).
    if Mp // tm < 2 and Mp >= 16:
        tm = _pick_tile(Mp, 8, max(8, Mp // 2))

    if (M, K) == (Mp, Kp):
        x_p = x2.astype(compute_dtype)          # no padding copy needed
    else:
        x_p = jnp.zeros((Mp, Kp), compute_dtype).at[:M, :K].set(
            x2.astype(compute_dtype))

    cd_size = jnp.dtype(compute_dtype).itemsize
    out_size = jnp.dtype(out_dtype).itemsize
    # Double-buffered footprint of the weight-resident path.
    resident_bytes = 2 * (Kp * Np * cd_size + tm * Kp * cd_size
                          + tm * Np * out_size + Np * 4)

    if resident_bytes <= _RESIDENT_VMEM_BUDGET:
        vmem_limit = max(32 << 20, min(resident_bytes + (8 << 20), 64 << 20))
        out_p = pl.pallas_call(
            _resident_linear_kernel,
            out_shape=jax.ShapeDtypeStruct((Mp, Np), out_dtype),
            grid_spec=pltpu.PrefetchScalarGridSpec(
                num_scalar_prefetch=0,
                grid=(Mp // tm,),
                in_specs=[
                    pl.BlockSpec((tm, Kp), lambda i: (i, 0)),
                    pl.BlockSpec((Kp, Np), lambda i: (0, 0)),  # VMEM-resident W^T
                    pl.BlockSpec((1, Np), lambda i: (0, 0)),   # VMEM-resident bias
                ],
                out_specs=pl.BlockSpec((tm, Np), lambda i: (i, 0)),
            ),
            compiler_params=pltpu.CompilerParams(
                dimension_semantics=("parallel",),
                vmem_limit_bytes=vmem_limit,
            ),
        )(x_p, wt_p, b_p)
    else:
        # Fallback: classic tiled matmul with K-reduction last + f32 accumulator.
        tn = _pick_tile(Np, 128, 256)
        tk = _pick_tile(Kp, 128, 1024)
        out_p = pl.pallas_call(
            _tiled_linear_kernel,
            out_shape=jax.ShapeDtypeStruct((Mp, Np), out_dtype),
            grid_spec=pltpu.PrefetchScalarGridSpec(
                num_scalar_prefetch=0,
                grid=(Mp // tm, Np // tn, Kp // tk),
                in_specs=[
                    pl.BlockSpec((tm, tk), lambda i, j, k: (i, k)),
                    pl.BlockSpec((tk, tn), lambda i, j, k: (k, j)),
                    pl.BlockSpec((1, tn), lambda i, j, k: (0, j)),
                ],
                out_specs=pl.BlockSpec((tm, tn), lambda i, j, k: (i, j)),
                scratch_shapes=[pltpu.VMEM((tm, tn), jnp.float32)],
            ),
            compiler_params=pltpu.CompilerParams(
                dimension_semantics=("parallel", "parallel", "arbitrary"),
                vmem_limit_bytes=64 << 20,
            ),
        )(x_p, wt_p, b_p)

    out = out_p[:M, :N]
    return out.reshape(*lead, N)


# ----------------------------------------------------------------------------
# Self-test
# ----------------------------------------------------------------------------
if __name__ == "__main__":
    key = jax.random.PRNGKey(0)
    kx, kw, kb, kx2 = jax.random.split(key, 4)

    # --- Case 1: module-faithful init (zero weight), Pallas-sized problem ----
    B, IN_DIM, NUM_CLASSES = 256, 512, 128
    x = jax.random.normal(kx, (B, IN_DIM), jnp.float32)
    weight = jnp.zeros((NUM_CLASSES, IN_DIM), jnp.float32)      # nn.init.zeros_
    bound = 1.0 / math.sqrt(IN_DIM)
    bias = jax.random.uniform(kb, (NUM_CLASSES,), jnp.float32, -bound, bound)

    params = prepare_classifier_params(weight, bias)            # one-time prep
    out = jax.block_until_ready(classifier_forward(x, params=params))
    ref = x @ weight.T + bias
    assert out.shape == (B, NUM_CLASSES)
    # zero weight -> output is exactly the (f32) bias, bf16 cast is irrelevant
    assert jnp.allclose(out, ref, atol=1e-5, rtol=1e-5), "mismatch (zero weight)"

    # --- Case 2: dense weight, bf16 MXU path, same kernel --------------------
    weight2 = jax.random.normal(kw, (NUM_CLASSES, IN_DIM), jnp.float32) * 0.02
    params2 = prepare_classifier_params(weight2, bias)
    out2 = jax.block_until_ready(classifier_forward(x, params=params2))
    ref2_bf16 = jnp.dot(x.astype(jnp.bfloat16), weight2.T.astype(jnp.bfloat16),
                        preferred_element_type=jnp.float32) + bias
    ref2_f32 = x @ weight2.T + bias
    assert jnp.allclose(out2, ref2_bf16, atol=5e-3, rtol=5e-3), "mismatch (bf16 ref)"
    assert jnp.allclose(out2, ref2_f32, atol=5e-2, rtol=5e-2), "mismatch (f32 ref)"

    # --- Case 3: non-aligned shapes exercising the padding path --------------
    B3, IN3, C3 = 200, 300, 17
    x3 = jax.random.normal(kx2, (B3, IN3), jnp.float32)
    w3 = jax.random.normal(kw, (C3, IN3), jnp.float32) * 0.05
    b3 = jax.random.uniform(kb, (C3,), jnp.float32, -0.1, 0.1)
    out3 = jax.block_until_ready(
        classifier_forward(x3, w3, b3, force_pallas=True))
    ref3 = jnp.dot(x3.astype(jnp.bfloat16), w3.T.astype(jnp.bfloat16),
                   preferred_element_type=jnp.float32) + b3
    assert out3.shape == (B3, C3)
    assert jnp.allclose(out3, ref3, atol=5e-3, rtol=5e-3), "mismatch (padded)"

    # --- Case 4: toy MLP-Mixer head shape -> tiny-problem XLA fast path ------
    B4, IN4, C4 = 8, 64, 10
    x4 = jax.random.normal(kx, (B4, IN4), jnp.float32)
    w4 = jnp.zeros((C4, IN4), jnp.float32)
    b4 = jax.random.uniform(kb, (C4,), jnp.float32, -1 / 8.0, 1 / 8.0)
    out4 = jax.block_until_ready(classifier_forward(x4, w4, b4))
    assert jnp.allclose(out4, x4 @ w4.T + b4, atol=1e-5, rtol=1e-5), "mismatch (tiny)"

    print("KERNEL_OK")
</pallas_src>

<mosaic_0001>
module attributes {stable_mosaic.version = 11 : i64} {
  func.func @_resident_linear_kernel(%arg0: i32, %arg1: memref<128x512xbf16, #tpu.memory_space<vmem>>, %arg2: memref<512x128xbf16, #tpu.memory_space<vmem>>, %arg3: memref<1x128xf32, #tpu.memory_space<vmem>>, %arg4: memref<128x128xf32, #tpu.memory_space<vmem>>) attributes {dimension_semantics = [#tpu.dimension_semantics<parallel>], iteration_bounds = array<i64: 2>, scalar_prefetch = 0 : i64, scratch_operands = 0 : i64, tpu.core_type = #tpu.core_type<tc>, window_params = [{transform_indices = @transform_0, window_bounds = array<i64: 128, 512>}, {pipeline_mode = #tpu.pipeline_mode<synchronous>, transform_indices = @transform_1, window_bounds = array<i64: 512, 128>}, {pipeline_mode = #tpu.pipeline_mode<synchronous>, transform_indices = @transform_2, window_bounds = array<i64: 1, 128>}, {transform_indices = @transform_3, window_bounds = array<i64: 128, 128>}]} {
    %c0 = arith.constant 0 : index
    %c0_0 = arith.constant 0 : index
    %0 = vector.load %arg1[%c0, %c0_0] : memref<128x512xbf16, #tpu.memory_space<vmem>>, vector<128x512xbf16>
    %c0_1 = arith.constant 0 : index
    %c0_2 = arith.constant 0 : index
    %1 = vector.load %arg2[%c0_1, %c0_2] : memref<512x128xbf16, #tpu.memory_space<vmem>>, vector<512x128xbf16>
    %cst = arith.constant dense<0.000000e+00> : vector<128x128xf32>
    %2 = tpu.matmul %0, %1, %cst {dimension_numbers = #tpu.dot_dimension_numbers<[1], [0], [0], [1], [0, 0, 1, 1], [], []>} : vector<128x512xbf16>, vector<512x128xbf16>, vector<128x128xf32> -> vector<128x128xf32>
    %c0_3 = arith.constant 0 : index
    %c0_4 = arith.constant 0 : index
    %3 = vector.load %arg3[%c0_3, %c0_4] : memref<1x128xf32, #tpu.memory_space<vmem>>, vector<1x128xf32>
    %4 = vector.broadcast %3 : vector<1x128xf32> to vector<128x128xf32>
    %5 = arith.addf %2, %4 : vector<128x128xf32>
    %c0_5 = arith.constant 0 : index
    %c0_6 = arith.constant 0 : index
    %6 = vector.load %arg4[%c0_5, %c0_6] : memref<128x128xf32, #tpu.memory_space<vmem>>, vector<128x128xf32>
    tpu.vector_store %arg4[%c0_5, %c0_6], %5 {strides = array<i32>} : memref<128x128xf32, #tpu.memory_space<vmem>>, vector<128x128xf32>,
    return
  }
  func.func @transform_0(%arg0: i32) -> (i32, i32) {
    %c0_i32 = arith.constant 0 : i32
    %c0_i32_0 = arith.constant 0 : i32
    return %arg0, %c0_i32 : i32, i32
  }
  func.func @transform_1(%arg0: i32) -> (i32, i32) {
    %c0_i32 = arith.constant 0 : i32
    %c0_i32_0 = arith.constant 0 : i32
    %c0_i32_1 = arith.constant 0 : i32
    return %c0_i32, %c0_i32_0 : i32, i32
  }
  func.func @transform_2(%arg0: i32) -> (i32, i32) {
    %c0_i32 = arith.constant 0 : i32
    %c0_i32_0 = arith.constant 0 : i32
    %c0_i32_1 = arith.constant 0 : i32
    return %c0_i32, %c0_i32_0 : i32, i32
  }
  func.func @transform_3(%arg0: i32) -> (i32, i32) {
    %c0_i32 = arith.constant 0 : i32
    %c0_i32_0 = arith.constant 0 : i32
    return %arg0, %c0_i32 : i32, i32
  }
}

</mosaic_0001>

<llo_original>
// kernel: tpu_custom_call.1
$region0: #{tpu_custom_call.1}
  #allocation0 [shape = 'u32[]', space=smem, size = 0x4, offset = 0x4, fixed_abs, tag = 'smem constant byte address 0x4 - core index']
  #allocation1 [shape = 'u32[144,128]{1,0:T(1,128)}', space=vmem, size = 0x12000, scoped, tag = 'internal scratch']
  %s0 = inlined_call_operand.hbm [shape: bf16[256,512], index: 0, kind: input, shape index: {}]
  %s1 = inlined_call_operand.hbm [shape: bf16[512,128], index: 1, kind: input, shape index: {}]
  %s2 = inlined_call_operand.vmem [shape: f32[1,128], index: 2, kind: input, shape index: {}]
  %s3 = inlined_call_operand.hbm [shape: f32[256,128], index: 3, kind: output, shape index: {}]
  %s4 = sld [smem:[#allocation0]]
  $region53: #{tpu_custom_call.1} parent=0
    _
  %s6 = ssub.s32 1, %s4
  %s7 = scalar_select 0, %s6, %s4
  $region1: #{tpu_custom_call.1} parent=0
    #allocation2 [shape = 'u8[262144]{0}', space=vmem, size = 0x40000, scoped, tag = 'input window, operand 0']
    #allocation3 [shape = 's32[2]{0}', space=sflag, size = 0x8, scoped, tag = 'scoped memory for tpu_custom_call.1']
    #allocation4 [shape = 's32[2]{0}', space=sflag, size = 0x8, scoped, tag = 'scoped memory for tpu_custom_call.1']
    #allocation5 [shape = 'u8[131072]{0}', space=vmem, size = 0x20000, scoped, tag = 'input window, operand 1, single buffered']
    #allocation6 [shape = 's32[1]{0}', space=sflag, size = 0x4, scoped, tag = 'scoped memory for tpu_custom_call.1']
    #allocation7 [shape = 'u8[131072]{0}', space=vmem, size = 0x20000, scoped, tag = 'output window, operand 0']
    %8 = vsyncpa [#allocation3], 0
    %s9 = scalar_lea.sflag [#allocation3], 1
    %10 = vsyncpa %s9, 0
    %11 = vsyncpa [#allocation6], 0
    %12 = vsyncpa [#allocation4], 0
    %s13 = scalar_lea.sflag [#allocation4], 1
    %14 = vsyncpa %s13, 0
    loop: start=0, step=1, limit=4
    $region2: #{tpu_custom_call.1} parent=1 // loop_pre_header
      _
    $region3: #{tpu_custom_call.1} parent=1 // loop_header
      %s16 = sphi 0, %s20
      %p17 = scmp.ge.s32.totalorder %s16, 4
      %s26 = sphi 0, %s28
      %s29 = sphi 0, %s26
      %s30 = sphi 0, %s29
      %s46 = sphi 0, %s30
      %s50 = sphi 0, %s50
      %s52 = sphi 0, %s50
      %s53 = sphi 0, %s52
      %s67 = sphi 0, %s53
      %s71 = sphi 0, %s71
      %s73 = sphi 0, %s71
      %s74 = sphi 0, %s73
      %s88 = sphi 0, %s74
      %s94 = sphi 0, %s96
      %s97 = sphi 0, %s94
      %s98 = sphi 0, %s97
      %s114 = sphi 0, %s98
    $region4: #{tpu_custom_call.1} parent=1 // loop_header_branch
      %19 = sbr.rel (%p17) target = $region8
    $region5: #{tpu_custom_call.1} parent=1 // loop_body
      %s21 = ssub.s32 %s16, 1
      %s22 = ssub.s32 %s16, 2
      %s23 = sadd.s32 %s16, 1
      %s24 = ssub.s32 %s16, %s23
      %p25 = scmp.eq.s32.totalorder %s24, 0
      %s27 = sadd.s32 %s26, 1
      %s28 = scalar_select %p25, %s26, %s27
      %p31 = pneg %p25
      %p32 = scmp.eq.s32.totalorder %s16, 1
      %p33 = por %p31, %p32
      %p34 = scmp.ne.s32.totalorder %s26, %s29
      %p35 = scmp.eq.s32.totalorder %s16, 0
      %p36 = por %p34, %p35
      %p37 = scmp.ne.s32.totalorder %s26, %s29
      %p38 = scmp.eq.s32.totalorder %s21, 1
      %p39 = por %p37, %p38
      %p40 = scmp.ne.s32.totalorder %s29, %s30
      %p41 = scmp.eq.s32.totalorder %s21, 0
      %p42 = por %p40, %p41
      %p43 = scmp.ne.s32.totalorder %s29, %s30
      %p44 = scmp.eq.s32.totalorder %s22, 1
      %p45 = por %p43, %p44
      %p47 = scmp.ne.s32.totalorder %s30, %s46
      %p48 = scmp.eq.s32.totalorder %s22, 0
      %p49 = por %p47, %p48
      %s51 = sadd.s32 %s50, 1
      %p54 = scmp.eq.s32.totalorder %s16, 1
      %p55 = scmp.ne.s32.totalorder %s50, %s52
      %p56 = scmp.eq.s32.totalorder %s16, 0
      %p57 = por %p55, %p56
      %p58 = scmp.ne.s32.totalorder %s50, %s52
      %p59 = scmp.eq.s32.totalorder %s21, 1
      %p60 = por %p58, %p59
      %p61 = scmp.ne.s32.totalorder %s52, %s53
      %p62 = scmp.eq.s32.totalorder %s21, 0
      %p63 = por %p61, %p62
      %p64 = scmp.ne.s32.totalorder %s52, %s53
      %p65 = scmp.eq.s32.totalorder %s22, 1
      %p66 = por %p64, %p65
      %p68 = scmp.ne.s32.totalorder %s53, %s67
      %p69 = scmp.eq.s32.totalorder %s22, 0
      %p70 = por %p68, %p69
      %s72 = sadd.s32 %s71, 1
      %p75 = scmp.eq.s32.totalorder %s16, 1
      %p76 = scmp.ne.s32.totalorder %s71, %s73
      %p77 = scmp.eq.s32.totalorder %s16, 0
      %p78 = por %p76, %p77
      %p79 = scmp.ne.s32.totalorder %s71, %s73
      %p80 = scmp.eq.s32.totalorder %s21, 1
      %p81 = por %p79, %p80
      %p82 = scmp.ne.s32.totalorder %s73, %s74
      %p83 = scmp.eq.s32.totalorder %s21, 0
      %p84 = por %p82, %p83
      %p85 = scmp.ne.s32.totalorder %s73, %s74
      %p86 = scmp.eq.s32.totalorder %s22, 1
      %p87 = por %p85, %p86
      %p89 = scmp.ne.s32.totalorder %s74, %s88
      %p90 = scmp.eq.s32.totalorder %s22, 0
      %p91 = por %p89, %p90
      %s92 = ssub.s32 %s16, %s23
      %p93 = scmp.eq.s32.totalorder %s92, 0
      %s95 = sadd.s32 %s94, 1
      %s96 = scalar_select %p93, %s94, %s95
      %p99 = pneg %p93
      %p100 = scmp.eq.s32.totalorder %s16, 1
      %p101 = por %p99, %p100
      %p102 = scmp.ne.s32.totalorder %s94, %s97
      %p103 = scmp.eq.s32.totalorder %s16, 0
      %p104 = por %p102, %p103
      %p105 = scmp.ne.s32.totalorder %s94, %s97
      %p106 = scmp.eq.s32.totalorder %s21, 1
      %p107 = por %p105, %p106
      %p108 = scmp.ne.s32.totalorder %s97, %s98
      %p109 = scmp.eq.s32.totalorder %s21, 0
      %p110 = por %p108, %p109
      %p111 = scmp.ne.s32.totalorder %s97, %s98
      %p112 = scmp.eq.s32.totalorder %s22, 1
      %p113 = por %p111, %p112
      %p115 = scmp.ne.s32.totalorder %s98, %s114
      %p116 = scmp.eq.s32.totalorder %s22, 0
      %p117 = por %p115, %p116
      %p118 = scmp.le.s32.totalorder 1, %s16
      %p119 = scmp.lt.s32.totalorder %s16, 3
      %p120 = pnand %p118, %p119
      %p121 = pneg %p120
      // Predicated region
      $region9: #{tpu_custom_call.1} parent=5 // pred_check
        _
      $region10: #{tpu_custom_call.1} parent=5 // pred_check_branch
        %123 = sbr.rel (%p120) target = $region12
      $region11: #{tpu_custom_call.1} parent=5 // pred_region
        %s124 = ssub.s32 %s16, 1
        // Predicated region
        $region13: #{tpu_custom_call.1} parent=11 // pred_check
          %p125 = pneg %p63
        $region14: #{tpu_custom_call.1} parent=11 // pred_check_branch
          %127 = sbr.rel (%p125) target = $region16
        $region15: #{tpu_custom_call.1} parent=11 // pred_region
          %s129 = ssub.s32 4096, 4096
          %130 = vsyncadd [#allocation6], %s129
          %s131 = sshll.u32 [#allocation5], 4
          %s132 = int_to_ptr.vmem [resolvable:$true] %s131
          %137 = dma.hbm_to_vmem [thread:$0]  %s1, 4096, %s132, [#allocation6], 64, 64, 4
        $region16: #{tpu_custom_call.1} parent=11 // pred_fallthru
          _
        // Predicated region
        $region17: #{tpu_custom_call.1} parent=11 // pred_check
          %p138 = pneg %p84
        $region18: #{tpu_custom_call.1} parent=11 // pred_check_branch
          %140 = sbr.rel (%p138) target = $region20
        $region19: #{tpu_custom_call.1} parent=11 // pred_region
          _
        $region20: #{tpu_custom_call.1} parent=11 // pred_fallthru
          _
      $region12: #{tpu_custom_call.1} parent=5 // pred_fallthru
        _
      %p141 = scmp.lt.s32.totalorder %s16, 2
      // Predicated region
      $region21: #{tpu_custom_call.1} parent=5 // pred_check
        %p142 = pneg %p141
      $region22: #{tpu_custom_call.1} parent=5 // pred_check_branch
        %144 = sbr.rel (%p142) target = $region24
      $region23: #{tpu_custom_call.1} parent=5 // pred_region
        // Predicated region
        $region25: #{tpu_custom_call.1} parent=23 // pred_check
          %p145 = pneg %p36
        $region26: #{tpu_custom_call.1} parent=23 // pred_check_branch
          %147 = sbr.rel (%p145) target = $region28
        $region27: #{tpu_custom_call.1} parent=23 // pred_region
          %s148 = sand.u32 %s26, 1
          %s149 = scalar_lea.sflag [#allocation3], %s148
          %s150 = sand.u32 %s26, 1
          %s151 = smul.addr %s150, 256
          %s152 = scalar_lea.vmem [#allocation2], %s151
          %s153 = smul.u32 16, %s16
          %s155 = ssub.s32 4096, 4096
          %156 = vsyncadd %s149, %s155
          %s157 = smul.addr %s153, 4
          %s158 = smul.addr %s157, 64
          %s159 = scalar_lea.hbm %s0, %s158
          %s160 = sshll.u32 %s152, 4
          %s161 = int_to_ptr.vmem [resolvable:$true] %s160
          %166 = dma.hbm_to_vmem [thread:$0]  %s159, 4096, %s161, %s149, 256, 256, 16
        $region28: #{tpu_custom_call.1} parent=23 // pred_fallthru
          _
      $region24: #{tpu_custom_call.1} parent=5 // pred_fallthru
        _
      %p167 = scmp.le.s32.totalorder 1, %s16
      %p168 = scmp.lt.s32.totalorder %s16, 3
      %p169 = pnand %p167, %p168
      %p170 = pneg %p169
      // Predicated region
      $region29: #{tpu_custom_call.1} parent=5 // pred_check
        _
      $region30: #{tpu_custom_call.1} parent=5 // pred_check_branch
        %172 = sbr.rel (%p169) target = $region32
      $region31: #{tpu_custom_call.1} parent=5 // pred_region
        %s173 = ssub.s32 %s16, 1
        %s174 = sand.u32 %s29, 1
        %s175 = scalar_lea.sflag [#allocation3], %s174
        %s176 = sand.u32 %s29, 1
        %s177 = smul.addr %s176, 256
        %s178 = scalar_lea.vmem [#allocation2], %s177
        // Predicated region
        $region33: #{tpu_custom_call.1} parent=31 // pred_check
          %p179 = pneg %p42
        $region34: #{tpu_custom_call.1} parent=31 // pred_check_branch
          %181 = sbr.rel (%p179) target = $region36
        $region35: #{tpu_custom_call.1} parent=31 // pred_region
          %182 = dma.done %s175, 4096
        $region36: #{tpu_custom_call.1} parent=31 // pred_fallthru
          _
        // Predicated region
        $region37: #{tpu_custom_call.1} parent=31 // pred_check
          %p183 = pneg %p63
        $region38: #{tpu_custom_call.1} parent=31 // pred_check_branch
          %185 = sbr.rel (%p183) target = $region40
        $region39: #{tpu_custom_call.1} parent=31 // pred_region
          %186 = dma.done [#allocation6], 4096
        $region40: #{tpu_custom_call.1} parent=31 // pred_fallthru
          _
        %s187 = sand.u32 %s29, 1
        %s188 = scalar_lea.sflag [#allocation3], %s187
        %s189 = sand.u32 %s29, 1
        %s190 = smul.addr %s189, 256
        %s191 = scalar_lea.vmem [#allocation2], %s190
        %p192 = pneg %p42
        %p193 = pneg %p39
        %p194 = pneg %p63
        %p195 = pneg %p60
        %p196 = pneg %p84
        %p197 = pneg %p81
        %p198 = pneg %p110
        %p199 = pneg %p107
        %s200 = sand.u32 %s97, 1
        %s201 = scalar_lea.sflag [#allocation4], %s200
        %s202 = sand.u32 %s97, 1
        %s203 = smul.addr %s202, 128
        %s204 = scalar_lea.vmem [#allocation7], %s203
        %s205 = smul.u32 16, %s21
        %s206 = smul.u32 16, %s21
        %v208 = vld [vmem:[%s178] sm:$0xff]
        %v209 = vld [vmem:[%s178 + $0x8] sm:$0xff]
        %v210 = vld [vmem:[%s178 + $0x10] sm:$0xff]
        %v211 = vld [vmem:[%s178 + $0x18] sm:$0xff]
        %v212 = vld [vmem:[%s178 + $0x20] sm:$0xff]
        %v213 = vld [vmem:[%s178 + $0x28] sm:$0xff]
        %v214 = vld [vmem:[%s178 + $0x30] sm:$0xff]
        %v215 = vld [vmem:[%s178 + $0x38] sm:$0xff]
        %v216 = vld [vmem:[%s178 + $0x40] sm:$0xff]
        %v217 = vld [vmem:[%s178 + $0x48] sm:$0xff]
        %v218 = vld [vmem:[%s178 + $0x50] sm:$0xff]
        %v219 = vld [vmem:[%s178 + $0x58] sm:$0xff]
        %v220 = vld [vmem:[%s178 + $0x60] sm:$0xff]
        %v221 = vld [vmem:[%s178 + $0x68] sm:$0xff]
        %v222 = vld [vmem:[%s178 + $0x70] sm:$0xff]
        %v223 = vld [vmem:[%s178 + $0x78] sm:$0xff]
        %v224 = vld [vmem:[%s178 + $0x80] sm:$0xff]
        %v225 = vld [vmem:[%s178 + $0x88] sm:$0xff]
        %v226 = vld [vmem:[%s178 + $0x90] sm:$0xff]
        %v227 = vld [vmem:[%s178 + $0x98] sm:$0xff]
        %v228 = vld [vmem:[%s178 + $0xa0] sm:$0xff]
        %v229 = vld [vmem:[%s178 + $0xa8] sm:$0xff]
        %v230 = vld [vmem:[%s178 + $0xb0] sm:$0xff]
        %v231 = vld [vmem:[%s178 + $0xb8] sm:$0xff]
        %v232 = vld [vmem:[%s178 + $0xc0] sm:$0xff]
        %v233 = vld [vmem:[%s178 + $0xc8] sm:$0xff]
        %v234 = vld [vmem:[%s178 + $0xd0] sm:$0xff]
        %v235 = vld [vmem:[%s178 + $0xd8] sm:$0xff]
        %v236 = vld [vmem:[%s178 + $0xe0] sm:$0xff]
        %v237 = vld [vmem:[%s178 + $0xe8] sm:$0xff]
        %v238 = vld [vmem:[%s178 + $0xf0] sm:$0xff]
        %v239 = vld [vmem:[%s178 + $0xf8] sm:$0xff]
        %v240 = vld [vmem:[#allocation5] sm:$0xf]
        %v241 = vld [vmem:[#allocation5 + $0x4] sm:$0xf]
        %v242 = vld [vmem:[#allocation5 + $0x8] sm:$0xf]
        %v243 = vld [vmem:[#allocation5 + $0xc] sm:$0xf]
        %v244 = vld [vmem:[#allocation5 + $0x10] sm:$0xf]
        %v245 = vld [vmem:[#allocation5 + $0x14] sm:$0xf]
        %v246 = vld [vmem:[#allocation5 + $0x18] sm:$0xf]
        %v247 = vld [vmem:[#allocation5 + $0x1c] sm:$0xf]
        %v248 = vld [vmem:[#allocation5 + $0x20] sm:$0xf]
        %v249 = vld [vmem:[#allocation5 + $0x24] sm:$0xf]
        %v250 = vld [vmem:[#allocation5 + $0x28] sm:$0xf]
        %v251 = vld [vmem:[#allocation5 + $0x2c] sm:$0xf]
        %v252 = vld [vmem:[#allocation5 + $0x30] sm:$0xf]
        %v253 = vld [vmem:[#allocation5 + $0x34] sm:$0xf]
        %v254 = vld [vmem:[#allocation5 + $0x38] sm:$0xf]
        %v255 = vld [vmem:[#allocation5 + $0x3c] sm:$0xf]
        %v256 = vld [vmem:[#allocation5 + $0x40] sm:$0xf]
        %v257 = vld [vmem:[#allocation5 + $0x44] sm:$0xf]
        %v258 = vld [vmem:[#allocation5 + $0x48] sm:$0xf]
        %v259 = vld [vmem:[#allocation5 + $0x4c] sm:$0xf]
        %v260 = vld [vmem:[#allocation5 + $0x50] sm:$0xf]
        %v261 = vld [vmem:[#allocation5 + $0x54] sm:$0xf]
        %v262 = vld [vmem:[#allocation5 + $0x58] sm:$0xf]
        %v263 = vld [vmem:[#allocation5 + $0x5c] sm:$0xf]
        %v264 = vld [vmem:[#allocation5 + $0x60] sm:$0xf]
        %v265 = vld [vmem:[#allocation5 + $0x64] sm:$0xf]
        %v266 = vld [vmem:[#allocation5 + $0x68] sm:$0xf]
        %v267 = vld [vmem:[#allocation5 + $0x6c] sm:$0xf]
        %v268 = vld [vmem:[#allocation5 + $0x70] sm:$0xf]
        %v269 = vld [vmem:[#allocation5 + $0x74] sm:$0xf]
        %v270 = vld [vmem:[#allocation5 + $0x78] sm:$0xf]
        %v271 = vld [vmem:[#allocation5 + $0x7c] sm:$0xf]
        %v272 = vld [vmem:[#allocation5 + $0x80] sm:$0xf]
        %v273 = vld [vmem:[#allocation5 + $0x84] sm:$0xf]
        %v274 = vld [vmem:[#allocation5 + $0x88] sm:$0xf]
        %v275 = vld [vmem:[#allocation5 + $0x8c] sm:$0xf]
        %v276 = vld [vmem:[#allocation5 + $0x90] sm:$0xf]
        %v277 = vld [vmem:[#allocation5 + $0x94] sm:$0xf]
        %v278 = vld [vmem:[#allocation5 + $0x98] sm:$0xf]
        %v279 = vld [vmem:[#allocation5 + $0x9c] sm:$0xf]
        %v280 = vld [vmem:[#allocation5 + $0xa0] sm:$0xf]
        %v281 = vld [vmem:[#allocation5 + $0xa4] sm:$0xf]
        %v282 = vld [vmem:[#allocation5 + $0xa8] sm:$0xf]
        %v283 = vld [vmem:[#allocation5 + $0xac] sm:$0xf]
        %v284 = vld [vmem:[#allocation5 + $0xb0] sm:$0xf]
        %v285 = vld [vmem:[#allocation5 + $0xb4] sm:$0xf]
        %v286 = vld [vmem:[#allocation5 + $0xb8] sm:$0xf]
        %v287 = vld [vmem:[#allocation5 + $0xbc] sm:$0xf]
        %v288 = vld [vmem:[#allocation5 + $0xc0] sm:$0xf]
        %v289 = vld [vmem:[#allocation5 + $0xc4] sm:$0xf]
        %v290 = vld [vmem:[#allocation5 + $0xc8] sm:$0xf]
        %v291 = vld [vmem:[#allocation5 + $0xcc] sm:$0xf]
        %v292 = vld [vmem:[#allocation5 + $0xd0] sm:$0xf]
        %v293 = vld [vmem:[#allocation5 + $0xd4] sm:$0xf]
        %v294 = vld [vmem:[#allocation5 + $0xd8] sm:$0xf]
        %v295 = vld [vmem:[#allocation5 + $0xdc] sm:$0xf]
        %v296 = vld [vmem:[#allocation5 + $0xe0] sm:$0xf]
        %v297 = vld [vmem:[#allocation5 + $0xe4] sm:$0xf]
        %v298 = vld [vmem:[#allocation5 + $0xe8] sm:$0xf]
        %v299 = vld [vmem:[#allocation5 + $0xec] sm:$0xf]
        %v300 = vld [vmem:[#allocation5 + $0xf0] sm:$0xf]
        %v301 = vld [vmem:[#allocation5 + $0xf4] sm:$0xf]
        %v302 = vld [vmem:[#allocation5 + $0xf8] sm:$0xf]
        %v303 = vld [vmem:[#allocation5 + $0xfc] sm:$0xf]
        %v304 = vld [vmem:[%s2] sm:$0x1]
        %v306 = vlaneseq
        %v307 = vshrl.u32 %v306, 7
        %v308 = vsub.s32 0, %v307
        %v309 = vrot.slane %v304, %v308
        %v343 = vunpack.c.l.b16 %v208
        %v344 = vunpack.c.h.b16 %v208
        %v345 = vunpack.c.l.b16 %v209
        %v346 = vunpack.c.h.b16 %v209
        %v347 = vunpack.c.l.b16 %v210
        %v348 = vunpack.c.h.b16 %v210
        %v349 = vunpack.c.l.b16 %v211
        %v350 = vunpack.c.h.b16 %v211
        %v351 = vunpack.c.l.b16 %v212
        %v352 = vunpack.c.h.b16 %v212
        %v353 = vunpack.c.l.b16 %v213
        %v354 = vunpack.c.h.b16 %v213
        %v355 = vunpack.c.l.b16 %v214
        %v356 = vunpack.c.h.b16 %v214
        %v357 = vunpack.c.l.b16 %v215
        %v358 = vunpack.c.h.b16 %v215
        %v359 = vunpack.c.l.b16 %v216
        %v360 = vunpack.c.h.b16 %v216
        %v361 = vunpack.c.l.b16 %v217
        %v362 = vunpack.c.h.b16 %v217
        %v363 = vunpack.c.l.b16 %v218
        %v364 = vunpack.c.h.b16 %v218
        %v365 = vunpack.c.l.b16 %v219
        %v366 = vunpack.c.h.b16 %v219
        %v367 = vunpack.c.l.b16 %v220
        %v368 = vunpack.c.h.b16 %v220
        %v369 = vunpack.c.l.b16 %v221
        %v370 = vunpack.c.h.b16 %v221
        %v371 = vunpack.c.l.b16 %v222
        %v372 = vunpack.c.h.b16 %v222
        %v373 = vunpack.c.l.b16 %v223
        %v374 = vunpack.c.h.b16 %v223
        %v375 = vunpack.c.l.b16 %v224
        %v376 = vunpack.c.h.b16 %v224
        %v377 = vunpack.c.l.b16 %v225
        %v378 = vunpack.c.h.b16 %v225
        %v379 = vunpack.c.l.b16 %v226
        %v380 = vunpack.c.h.b16 %v226
        %v381 = vunpack.c.l.b16 %v227
        %v382 = vunpack.c.h.b16 %v227
        %v383 = vunpack.c.l.b16 %v228
        %v384 = vunpack.c.h.b16 %v228
        %v385 = vunpack.c.l.b16 %v229
        %v386 = vunpack.c.h.b16 %v229
        %v387 = vunpack.c.l.b16 %v230
        %v388 = vunpack.c.h.b16 %v230
        %v389 = vunpack.c.l.b16 %v231
        %v390 = vunpack.c.h.b16 %v231
        %v391 = vunpack.c.l.b16 %v232
        %v392 = vunpack.c.h.b16 %v232
        %v393 = vunpack.c.l.b16 %v233
        %v394 = vunpack.c.h.b16 %v233
        %v395 = vunpack.c.l.b16 %v234
        %v396 = vunpack.c.h.b16 %v234
        %v397 = vunpack.c.l.b16 %v235
        %v398 = vunpack.c.h.b16 %v235
        %v399 = vunpack.c.l.b16 %v236
        %v400 = vunpack.c.h.b16 %v236
        %v401 = vunpack.c.l.b16 %v237
        %v402 = vunpack.c.h.b16 %v237
        %v403 = vunpack.c.l.b16 %v238
        %v404 = vunpack.c.h.b16 %v238
        %v405 = vunpack.c.l.b16 %v239
        %v406 = vunpack.c.h.b16 %v239
        %v407 = vpack.c.b16 %v347, %v343
        %v408 = vpack.c.b16 %v348, %v344
        %v409 = vpack.c.b16 %v349, %v345
        %v410 = vpack.c.b16 %v350, %v346
        %v411 = vpack.c.b16 %v355, %v351
        %v412 = vpack.c.b16 %v356, %v352
        %v413 = vpack.c.b16 %v357, %v353
        %v414 = vpack.c.b16 %v358, %v354
        %v415 = vpack.c.b16 %v363, %v359
        %v416 = vpack.c.b16 %v364, %v360
        %v417 = vpack.c.b16 %v365, %v361
        %v418 = vpack.c.b16 %v366, %v362
        %v419 = vpack.c.b16 %v371, %v367
        %v420 = vpack.c.b16 %v372, %v368
        %v421 = vpack.c.b16 %v373, %v369
        %v422 = vpack.c.b16 %v374, %v370
        %v423 = vpack.c.b16 %v379, %v375
        %v424 = vpack.c.b16 %v380, %v376
        %v425 = vpack.c.b16 %v381, %v377
        %v426 = vpack.c.b16 %v382, %v378
        %v427 = vpack.c.b16 %v387, %v383
        %v428 = vpack.c.b16 %v388, %v384
        %v429 = vpack.c.b16 %v389, %v385
        %v430 = vpack.c.b16 %v390, %v386
        %v431 = vpack.c.b16 %v395, %v391
        %v432 = vpack.c.b16 %v396, %v392
        %v433 = vpack.c.b16 %v397, %v393
        %v434 = vpack.c.b16 %v398, %v394
        %v435 = vpack.c.b16 %v403, %v399
        %v436 = vpack.c.b16 %v404, %v400
        %v437 = vpack.c.b16 %v405, %v401
        %v438 = vpack.c.b16 %v406, %v402
        %v535 = vunpack.c.l.b16 %v240
        %v536 = vunpack.c.l.b16 %v241
        %v537 = vunpack.c.l.b16 %v242
        %v538 = vunpack.c.l.b16 %v243
        %v539 = vunpack.c.l.b16 %v244
        %v540 = vunpack.c.l.b16 %v245
        %v541 = vunpack.c.l.b16 %v246
        %v542 = vunpack.c.l.b16 %v247
        %v543 = vunpack.c.l.b16 %v248
        %v544 = vunpack.c.l.b16 %v249
        %v545 = vunpack.c.l.b16 %v250
        %v546 = vunpack.c.l.b16 %v251
        %v547 = vunpack.c.l.b16 %v252
        %v548 = vunpack.c.l.b16 %v253
        %v549 = vunpack.c.l.b16 %v254
        %v550 = vunpack.c.l.b16 %v255
        %v551 = vunpack.c.l.b16 %v256
        %v552 = vunpack.c.l.b16 %v257
        %v553 = vunpack.c.l.b16 %v258
        %v554 = vunpack.c.l.b16 %v259
        %v555 = vunpack.c.l.b16 %v260
        %v556 = vunpack.c.l.b16 %v261
        %v557 = vunpack.c.l.b16 %v262
        %v558 = vunpack.c.l.b16 %v263
        %v559 = vunpack.c.l.b16 %v264
        %v560 = vunpack.c.l.b16 %v265
        %v561 = vunpack.c.l.b16 %v266
        %v562 = vunpack.c.l.b16 %v267
        %v563 = vunpack.c.l.b16 %v268
        %v564 = vunpack.c.l.b16 %v269
        %v565 = vunpack.c.l.b16 %v270
        %v566 = vunpack.c.l.b16 %v271
        %v567 = vunpack.c.l.b16 %v272
        %v568 = vunpack.c.l.b16 %v273
        %v569 = vunpack.c.l.b16 %v274
        %v570 = vunpack.c.l.b16 %v275
        %v571 = vunpack.c.l.b16 %v276
        %v572 = vunpack.c.l.b16 %v277
        %v573 = vunpack.c.l.b16 %v278
        %v574 = vunpack.c.l.b16 %v279
        %v575 = vunpack.c.l.b16 %v280
        %v576 = vunpack.c.l.b16 %v281
        %v577 = vunpack.c.l.b16 %v282
        %v578 = vunpack.c.l.b16 %v283
        %v579 = vunpack.c.l.b16 %v284
        %v580 = vunpack.c.l.b16 %v285
        %v581 = vunpack.c.l.b16 %v286
        %v582 = vunpack.c.l.b16 %v287
        %v583 = vunpack.c.l.b16 %v288
        %v584 = vunpack.c.l.b16 %v289
        %v585 = vunpack.c.l.b16 %v290
        %v586 = vunpack.c.l.b16 %v291
        %v587 = vunpack.c.l.b16 %v292
        %v588 = vunpack.c.l.b16 %v293
        %v589 = vunpack.c.l.b16 %v294
        %v590 = vunpack.c.l.b16 %v295
        %v591 = vunpack.c.l.b16 %v296
        %v592 = vunpack.c.l.b16 %v297
        %v593 = vunpack.c.l.b16 %v298
        %v594 = vunpack.c.l.b16 %v299
        %v595 = vunpack.c.l.b16 %v300
        %v596 = vunpack.c.l.b16 %v301
        %v597 = vunpack.c.l.b16 %v302
        %v598 = vunpack.c.l.b16 %v303
        %v599 = vpack.c.b16 %v536, %v535
        %v600 = vpack.c.b16 %v538, %v537
        %v601 = vpack.c.b16 %v540, %v539
        %v602 = vpack.c.b16 %v542, %v541
        %v603 = vpack.c.b16 %v544, %v543
        %v604 = vpack.c.b16 %v546, %v545
        %v605 = vpack.c.b16 %v548, %v547
        %v606 = vpack.c.b16 %v550, %v549
        %v607 = vpack.c.b16 %v552, %v551
        %v608 = vpack.c.b16 %v554, %v553
        %v609 = vpack.c.b16 %v556, %v555
        %v610 = vpack.c.b16 %v558, %v557
        %v611 = vpack.c.b16 %v560, %v559
        %v612 = vpack.c.b16 %v562, %v561
        %v613 = vpack.c.b16 %v564, %v563
        %v614 = vpack.c.b16 %v566, %v565
        %v615 = vpack.c.b16 %v568, %v567
        %v616 = vpack.c.b16 %v570, %v569
        %v617 = vpack.c.b16 %v572, %v571
        %v618 = vpack.c.b16 %v574, %v573
        %v619 = vpack.c.b16 %v576, %v575
        %v620 = vpack.c.b16 %v578, %v577
        %v621 = vpack.c.b16 %v580, %v579
        %v622 = vpack.c.b16 %v582, %v581
        %v623 = vpack.c.b16 %v584, %v583
        %v624 = vpack.c.b16 %v586, %v585
        %v625 = vpack.c.b16 %v588, %v587
        %v626 = vpack.c.b16 %v590, %v589
        %v627 = vpack.c.b16 %v592, %v591
        %v628 = vpack.c.b16 %v594, %v593
        %v629 = vpack.c.b16 %v596, %v595
        %v630 = vpack.c.b16 %v598, %v597
        %663 = vmatprep.subr.bf16.mxu0 0
        %664 = vmatpush1.bf16.msra.mxu0 %v606
        %665 = vmatprep.subr.bf16.mxu0 0
        %666 = vmatpush1.bf16.msra.mxu0 %v605
        %667 = vmatprep.subr.bf16.mxu0 0
        %668 = vmatpush1.bf16.msra.mxu0 %v604
        %669 = vmatprep.subr.bf16.mxu0 0
        %670 = vmatpush1.bf16.msra.mxu0 %v603
        %671 = vmatprep.subr.bf16.mxu0 0
        %672 = vmatpush1.bf16.msra.mxu0 %v602
        %673 = vmatprep.subr.bf16.mxu0 0
        %674 = vmatpush1.bf16.msra.mxu0 %v601
        %675 = vmatprep.subr.bf16.mxu0 0
        %676 = vmatpush1.bf16.msra.mxu0 %v600
        %677 = vmatprep.subr.bf16.mxu0 0
        %678 = vmatpush1.bf16.msra.mxu0 %v599
        %679 = vmatprep.subr.bf16.mxu0 0
        %680 = vmatpush2.bf16.msra.mxu0 %v614
        %681 = vmatprep.subr.bf16.mxu0 0
        %682 = vmatpush2.bf16.msra.mxu0 %v613
        %683 = vmatprep.subr.bf16.mxu0 0
        %684 = vmatpush2.bf16.msra.mxu0 %v612
        %685 = vmatprep.subr.bf16.mxu0 0
        %686 = vmatpush2.bf16.msra.mxu0 %v611
        %687 = vmatprep.subr.bf16.mxu0 0
        %688 = vmatpush2.bf16.msra.mxu0 %v610
        %689 = vmatprep.subr.bf16.mxu0 0
        %690 = vmatpush2.bf16.msra.mxu0 %v609
        %691 = vmatprep.subr.bf16.mxu0 0
        %692 = vmatpush2.bf16.msra.mxu0 %v608
        %693 = vmatprep.subr.bf16.mxu0 0
        %694 = vmatpush2.bf16.msra.mxu0 %v607
        %695 = vmatprep.mubr.bf16.mxu0 %v408
        %696 = vmatmul.mubr.bf16.gmra.mxu0 %v407
        %v697 = vpop.f32.mrf.mxu0
        %v698 = vadd.f32 %v309, %v697
        %v699 = vpop.f32.mrf.mxu0
        %v700 = vpop.f32.mrf.mxu0
        %v701 = vadd.f32 %v309, %v700
        %v702 = vpop.f32.mrf.mxu0
        %703 = vmatprep.mubr.bf16.mxu0 %v412
        %704 = vmatmul.mubr.bf16.gmra.mxu0 %v411
        %v705 = vpop.f32.mrf.mxu0
        %v706 = vadd.f32 %v309, %v705
        %v707 = vpop.f32.mrf.mxu0
        %v708 = vpop.f32.mrf.mxu0
        %v709 = vadd.f32 %v309, %v708
        %v710 = vpop.f32.mrf.mxu0
        %711 = vmatprep.mubr.bf16.mxu0 %v416
        %712 = vmatmul.mubr.bf16.gmra.mxu0 %v415
        %v713 = vpop.f32.mrf.mxu0
        %v714 = vadd.f32 %v309, %v713
        %v715 = vpop.f32.mrf.mxu0
        %v716 = vpop.f32.mrf.mxu0
        %v717 = vadd.f32 %v309, %v716
        %v718 = vpop.f32.mrf.mxu0
        %719 = vmatprep.mubr.bf16.mxu0 %v420
        %720 = vmatmul.mubr.bf16.gmra.mxu0 %v419
        %v721 = vpop.f32.mrf.mxu0
        %v722 = vadd.f32 %v309, %v721
        %v723 = vpop.f32.mrf.mxu0
        %v724 = vpop.f32.mrf.mxu0
        %v725 = vadd.f32 %v309, %v724
        %v726 = vpop.f32.mrf.mxu0
        %727 = vmatprep.mubr.bf16.mxu0 %v424
        %728 = vmatmul.mubr.bf16.gmra.mxu0 %v423
        %v729 = vpop.f32.mrf.mxu0
        %v730 = vadd.f32 %v309, %v729
        %v731 = vpop.f32.mrf.mxu0
        %v732 = vpop.f32.mrf.mxu0
        %v733 = vadd.f32 %v309, %v732
        %v734 = vpop.f32.mrf.mxu0
        %735 = vmatprep.mubr.bf16.mxu0 %v428
        %736 = vmatmul.mubr.bf16.gmra.mxu0 %v427
        %v737 = vpop.f32.mrf.mxu0
        %v738 = vadd.f32 %v309, %v737
        %v739 = vpop.f32.mrf.mxu0
        %v740 = vpop.f32.mrf.mxu0
        %v741 = vadd.f32 %v309, %v740
        %v742 = vpop.f32.mrf.mxu0
        %743 = vmatprep.mubr.bf16.mxu0 %v432
        %744 = vmatmul.mubr.bf16.gmra.mxu0 %v431
        %v745 = vpop.f32.mrf.mxu0
        %v746 = vadd.f32 %v309, %v745
        %v747 = vpop.f32.mrf.mxu0
        %v748 = vpop.f32.mrf.mxu0
        %v749 = vadd.f32 %v309, %v748
        %v750 = vpop.f32.mrf.mxu0
        %751 = vmatprep.mubr.bf16.mxu0 %v436
        %752 = vmatmul.mubr.bf16.gmra.mxu0 %v435
        %v753 = vpop.f32.mrf.mxu0
        %v754 = vadd.f32 %v309, %v753
        %v755 = vpop.f32.mrf.mxu0
        %v756 = vpop.f32.mrf.mxu0
        %v757 = vadd.f32 %v309, %v756
        %v758 = vpop.f32.mrf.mxu0
        %759 = vdwg.mxu0
        %760 = vmatprep.subr.bf16.mxu0 0
        %761 = vmatpush1.bf16.msra.mxu0 %v622
        %762 = vmatprep.subr.bf16.mxu0 0
        %763 = vmatpush1.bf16.msra.mxu0 %v621
        %764 = vmatprep.subr.bf16.mxu0 0
        %765 = vmatpush1.bf16.msra.mxu0 %v620
        %766 = vmatprep.subr.bf16.mxu0 0
        %767 = vmatpush1.bf16.msra.mxu0 %v619
        %768 = vmatprep.subr.bf16.mxu0 0
        %769 = vmatpush1.bf16.msra.mxu0 %v618
        %770 = vmatprep.subr.bf16.mxu0 0
        %771 = vmatpush1.bf16.msra.mxu0 %v617
        %772 = vmatprep.subr.bf16.mxu0 0
        %773 = vmatpush1.bf16.msra.mxu0 %v616
        %774 = vmatprep.subr.bf16.mxu0 0
        %775 = vmatpush1.bf16.msra.mxu0 %v615
        %776 = vmatprep.subr.bf16.mxu0 0
        %777 = vmatpush2.bf16.msra.mxu0 %v630
        %778 = vmatprep.subr.bf16.mxu0 0
        %779 = vmatpush2.bf16.msra.mxu0 %v629
        %780 = vmatprep.subr.bf16.mxu0 0
        %781 = vmatpush2.bf16.msra.mxu0 %v628
        %782 = vmatprep.subr.bf16.mxu0 0
        %783 = vmatpush2.bf16.msra.mxu0 %v627
        %784 = vmatprep.subr.bf16.mxu0 0
        %785 = vmatpush2.bf16.msra.mxu0 %v626
        %786 = vmatprep.subr.bf16.mxu0 0
        %787 = vmatpush2.bf16.msra.mxu0 %v625
        %788 = vmatprep.subr.bf16.mxu0 0
        %789 = vmatpush2.bf16.msra.mxu0 %v624
        %790 = vmatprep.subr.bf16.mxu0 0
        %791 = vmatpush2.bf16.msra.mxu0 %v623
        %792 = vmatprep.mubr.bf16.mxu0 %v410
        %793 = vmatmul.mubr.bf16.gmra.mxu0 %v409
        %v794 = vpop.f32.mrf.mxu0
        %v795 = vadd.f32 %v698, %v794
        %v796 = vpop.f32.mrf.mxu0
        %v797 = vpop.f32.mrf.mxu0
        %v798 = vadd.f32 %v701, %v797
        %v799 = vpop.f32.mrf.mxu0
        %800 = vmatprep.mubr.bf16.mxu0 %v414
        %801 = vmatmul.mubr.bf16.gmra.mxu0 %v413
        %v802 = vpop.f32.mrf.mxu0
        %v803 = vadd.f32 %v706, %v802
        %v804 = vpop.f32.mrf.mxu0
        %v805 = vpop.f32.mrf.mxu0
        %v806 = vadd.f32 %v709, %v805
        %v807 = vpop.f32.mrf.mxu0
        %808 = vmatprep.mubr.bf16.mxu0 %v418
        %809 = vmatmul.mubr.bf16.gmra.mxu0 %v417
        %v810 = vpop.f32.mrf.mxu0
        %v811 = vadd.f32 %v714, %v810
        %v812 = vpop.f32.mrf.mxu0
        %v813 = vpop.f32.mrf.mxu0
        %v814 = vadd.f32 %v717, %v813
        %v815 = vpop.f32.mrf.mxu0
        %816 = vmatprep.mubr.bf16.mxu0 %v422
        %817 = vmatmul.mubr.bf16.gmra.mxu0 %v421
        %v818 = vpop.f32.mrf.mxu0
        %v819 = vadd.f32 %v722, %v818
        %v820 = vpop.f32.mrf.mxu0
        %v821 = vpop.f32.mrf.mxu0
        %v822 = vadd.f32 %v725, %v821
        %v823 = vpop.f32.mrf.mxu0
        %824 = vmatprep.mubr.bf16.mxu0 %v426
        %825 = vmatmul.mubr.bf16.gmra.mxu0 %v425
        %v826 = vpop.f32.mrf.mxu0
        %v827 = vadd.f32 %v730, %v826
        %v828 = vpop.f32.mrf.mxu0
        %v829 = vpop.f32.mrf.mxu0
        %v830 = vadd.f32 %v733, %v829
        %v831 = vpop.f32.mrf.mxu0
        %832 = vmatprep.mubr.bf16.mxu0 %v430
        %833 = vmatmul.mubr.bf16.gmra.mxu0 %v429
        %v834 = vpop.f32.mrf.mxu0
        %v835 = vadd.f32 %v738, %v834
        %v836 = vpop.f32.mrf.mxu0
        %v837 = vpop.f32.mrf.mxu0
        %v838 = vadd.f32 %v741, %v837
        %v839 = vpop.f32.mrf.mxu0
        %840 = vmatprep.mubr.bf16.mxu0 %v434
        %841 = vmatmul.mubr.bf16.gmra.mxu0 %v433
        %v842 = vpop.f32.mrf.mxu0
        %v843 = vadd.f32 %v746, %v842
        %v844 = vpop.f32.mrf.mxu0
        %v845 = vpop.f32.mrf.mxu0
        %v846 = vadd.f32 %v749, %v845
        %v847 = vpop.f32.mrf.mxu0
        %848 = vmatprep.mubr.bf16.mxu0 %v438
        %849 = vmatmul.mubr.bf16.gmra.mxu0 %v437
        %v850 = vpop.f32.mrf.mxu0
        %v851 = vadd.f32 %v754, %v850
        %v852 = vpop.f32.mrf.mxu0
        %v853 = vpop.f32.mrf.mxu0
        %v854 = vadd.f32 %v757, %v853
        %v855 = vpop.f32.mrf.mxu0
        %856 = vdwg.mxu0
        %857 = vst [vmem:[%s204] sm:$0xff] %v795
        %858 = vst [vmem:[%s204 + $0x8] sm:$0xff] %v798
        %859 = vst [vmem:[%s204 + $0x10] sm:$0xff] %v803
        %860 = vst [vmem:[%s204 + $0x18] sm:$0xff] %v806
        %861 = vst [vmem:[%s204 + $0x20] sm:$0xff] %v811
        %862 = vst [vmem:[%s204 + $0x28] sm:$0xff] %v814
        %863 = vst [vmem:[%s204 + $0x30] sm:$0xff] %v819
        %864 = vst [vmem:[%s204 + $0x38] sm:$0xff] %v822
        %865 = vst [vmem:[%s204 + $0x40] sm:$0xff] %v827
        %866 = vst [vmem:[%s204 + $0x48] sm:$0xff] %v830
        %867 = vst [vmem:[%s204 + $0x50] sm:$0xff] %v835
        %868 = vst [vmem:[%s204 + $0x58] sm:$0xff] %v838
        %869 = vst [vmem:[%s204 + $0x60] sm:$0xff] %v843
        %870 = vst [vmem:[%s204 + $0x68] sm:$0xff] %v846
        %871 = vst [vmem:[%s204 + $0x70] sm:$0xff] %v851
        %872 = vst [vmem:[%s204 + $0x78] sm:$0xff] %v854
        %s873 = sand.u32 %s97, 1
        %s874 = scalar_lea.sflag [#allocation4], %s873
        %s875 = sand.u32 %s97, 1
        %s876 = smul.addr %s875, 128
        %s877 = scalar_lea.vmem [#allocation7], %s876
        // Predicated region
        $region41: #{tpu_custom_call.1} parent=31 // pred_check
          %p878 = pneg %p107
        $region42: #{tpu_custom_call.1} parent=31 // pred_check_branch
          %880 = sbr.rel (%p878) target = $region44
        $region43: #{tpu_custom_call.1} parent=31 // pred_region
          %s881 = smul.u32 16, %s21
          %s883 = ssub.s32 2048, 2048
          %884 = vsyncadd %s874, %s883
          %s885 = smul.addr %s881, 128
          %s886 = scalar_lea.hbm %s3, %s885
          %s887 = sshll.u32 %s877, 4
          %s888 = int_to_ptr.vmem [resolvable:$true] %s887
          %893 = dma.vmem_to_hbm [thread:$0]  %s888, 2048, %s886, %s874, 128, 128, 8
        $region44: #{tpu_custom_call.1} parent=31 // pred_fallthru
          _
      $region32: #{tpu_custom_call.1} parent=5 // pred_fallthru
        _
      %p894 = scmp.le.s32.totalorder 2, %s16
      // Predicated region
      $region45: #{tpu_custom_call.1} parent=5 // pred_check
        %p895 = pneg %p894
      $region46: #{tpu_custom_call.1} parent=5 // pred_check_branch
        %897 = sbr.rel (%p895) target = $region48
      $region47: #{tpu_custom_call.1} parent=5 // pred_region
        %s898 = ssub.s32 %s16, 2
        // Predicated region
        $region49: #{tpu_custom_call.1} parent=47 // pred_check
          %p899 = pneg %p113
        $region50: #{tpu_custom_call.1} parent=47 // pred_check_branch
          %901 = sbr.rel (%p899) target = $region52
        $region51: #{tpu_custom_call.1} parent=47 // pred_region
          %s902 = sand.u32 %s98, 1
          %s903 = scalar_lea.sflag [#allocation4], %s902
          %s904 = sand.u32 %s98, 1
          %s905 = smul.addr %s904, 128
          %s906 = scalar_lea.vmem [#allocation7], %s905
          %907 = dma.done %s903, 2048
        $region52: #{tpu_custom_call.1} parent=47 // pred_fallthru
          _
      $region48: #{tpu_custom_call.1} parent=5 // pred_fallthru
        _
    $region6: #{tpu_custom_call.1} parent=1 // loop_footer
      %s20 = sadd.s32 1, %s16
    $region7: #{tpu_custom_call.1} parent=1 // loop_footer_branch
      %15 = sbr.rel target = $region3
    $region8: #{tpu_custom_call.1} parent=1 // loop_exit
      _
    %908 = vsyncpa [#allocation3], 1
    %s909 = scalar_lea.sflag [#allocation3], 1
    %910 = vsyncpa %s909, 1
    %911 = vsyncpa [#allocation6], 1
    %912 = vsyncpa [#allocation4], 1
    %s913 = scalar_lea.sflag [#allocation4], 1
    %914 = vsyncpa %s913, 1

</llo_original>
